<compile_context>
chip_gen: v7x
topology: tpu7x:2x2x1
jax: 0.10.0
libtpu: 0.0.40
codegen_flags: <defaults>
</compile_context>

<pallas_src>
import jax
import jax.numpy as jnp
from jax.experimental import pallas as pl
from jax.experimental.pallas import tpu as pltpu


def ensemble_kernel(w_ref, x_ref, w1_ref, w2_ref, bcomb_ref, o_ref):
    """Single grid step; whole problem resident in VMEM.

    w_ref     : SMEM (2,)     ensemble weights [w0, w1]
    x_ref     : VMEM (B, F)   flattened input
    w1_ref    : VMEM (F, K)   model1 linear-head weights
    w2_ref    : VMEM (F, K)   model2 linear-head weights
    bcomb_ref : VMEM (1, K)   pre-folded bias w0*b1 + w1*b2
    o_ref     : VMEM (B, K)   combined logits
    """
    x = x_ref[...]
    # Two MXU passes (same push count as one fused N=2K pass); results are
    # vreg-aligned so the combine below is pure VPU work, no cross-lane ops.
    logits1 = jnp.dot(x, w1_ref[...], preferred_element_type=jnp.float32)
    logits2 = jnp.dot(x, w2_ref[...], preferred_element_type=jnp.float32)
    o_ref[...] = logits1 * w_ref[0] + logits2 * w_ref[1] + bcomb_ref[...]


def rice_leaf_classifier_forward(x, weights, W1, b1, W2, b2):
    """x: [B, C, H, W] float32 (NCHW); weights: [2] float32 ensemble weights."""
    B, C, H, Wd = x.shape
    F = C * H * Wd
    K = W1.shape[1]

    x_flat = x.reshape(B, F)                              # torch .view(B, -1)
    # Fold ensemble weights into the bias (K elements — effectively free):
    # w0*(x@W1 + b1) + w1*(x@W2 + b2) == w0*(x@W1) + w1*(x@W2) + (w0*b1 + w1*b2)
    b_comb = (weights[0] * b1 + weights[1] * b2).reshape(1, K)

    return pl.pallas_call(
        ensemble_kernel,
        out_shape=jax.ShapeDtypeStruct((B, K), jnp.float32),
        in_specs=[
            pl.BlockSpec(memory_space=pltpu.MemorySpace.SMEM),   # ensemble weights
            pl.BlockSpec(memory_space=pltpu.MemorySpace.VMEM),   # x_flat
            pl.BlockSpec(memory_space=pltpu.MemorySpace.VMEM),   # W1
            pl.BlockSpec(memory_space=pltpu.MemorySpace.VMEM),   # W2
            pl.BlockSpec(memory_space=pltpu.MemorySpace.VMEM),   # b_comb
        ],
        out_specs=pl.BlockSpec(memory_space=pltpu.MemorySpace.VMEM),
    )(weights, x_flat, W1, W2, b_comb)


if __name__ == "__main__":
    # Small shapes consistent with an NCHW image classifier input.
    B, C, H, W = 2, 4, 16, 16
    K = 8                               # num_classes
    F = C * H * W                       # 1024 flattened features

    key = jax.random.PRNGKey(0)
    kx, kw1, kb1, kw2, kb2 = jax.random.split(key, 5)

    x = jax.random.normal(kx, (B, C, H, W), dtype=jnp.float32)
    # Deterministic synthetic parameters for the two sub-classifiers.
    W1 = 0.02 * jax.random.normal(kw1, (F, K), dtype=jnp.float32)
    b1 = 0.01 * jax.random.normal(kb1, (K,), dtype=jnp.float32)
    W2 = 0.02 * jax.random.normal(kw2, (F, K), dtype=jnp.float32)
    b2 = 0.01 * jax.random.normal(kb2, (K,), dtype=jnp.float32)
    # Ensemble weights (e.g. 0.6 / 0.4 blend, as in the PyTorch forward).
    weights = jnp.array([0.6, 0.4], dtype=jnp.float32)

    out = rice_leaf_classifier_forward(x, weights, W1, b1, W2, b2)
    out = jax.block_until_ready(out)

    # Pure-JAX reference for correctness.
    x_flat = x.reshape(B, F)
    ref = ((x_flat @ W1 + b1) * weights[0] + (x_flat @ W2 + b2) * weights[1])
    assert out.shape == (B, K)
    assert jnp.allclose(out, ref, atol=1e-4, rtol=1e-4)

    print("KERNEL_OK")
</pallas_src>

<mosaic_0001>
module attributes {stable_mosaic.version = 11 : i64} {
  func.func @ensemble_kernel(%arg0: memref<2xf32, #tpu.memory_space<smem>>, %arg1: memref<2x1024xf32, #tpu.memory_space<vmem>>, %arg2: memref<1024x8xf32, #tpu.memory_space<vmem>>, %arg3: memref<1024x8xf32, #tpu.memory_space<vmem>>, %arg4: memref<1x8xf32, #tpu.memory_space<vmem>>, %arg5: memref<2x8xf32, #tpu.memory_space<vmem>>) attributes {dimension_semantics = [], scalar_prefetch = 0 : i64, scratch_operands = 0 : i64, tpu.core_type = #tpu.core_type<tc>} {
    %c0 = arith.constant 0 : index
    %c0_0 = arith.constant 0 : index
    %0 = vector.load %arg1[%c0, %c0_0] : memref<2x1024xf32, #tpu.memory_space<vmem>>, vector<2x1024xf32>
    %c0_1 = arith.constant 0 : index
    %c0_2 = arith.constant 0 : index
    %1 = vector.load %arg2[%c0_1, %c0_2] : memref<1024x8xf32, #tpu.memory_space<vmem>>, vector<1024x8xf32>
    %cst = arith.constant dense<0.000000e+00> : vector<2x8xf32>
    %2 = tpu.matmul %0, %1, %cst {dimension_numbers = #tpu.dot_dimension_numbers<[1], [0], [0], [1], [0, 0, 1, 1], [], []>} : vector<2x1024xf32>, vector<1024x8xf32>, vector<2x8xf32> -> vector<2x8xf32>
    %c0_3 = arith.constant 0 : index
    %c0_4 = arith.constant 0 : index
    %3 = vector.load %arg3[%c0_3, %c0_4] : memref<1024x8xf32, #tpu.memory_space<vmem>>, vector<1024x8xf32>
    %cst_5 = arith.constant dense<0.000000e+00> : vector<2x8xf32>
    %4 = tpu.matmul %0, %3, %cst_5 {dimension_numbers = #tpu.dot_dimension_numbers<[1], [0], [0], [1], [0, 0, 1, 1], [], []>} : vector<2x1024xf32>, vector<1024x8xf32>, vector<2x8xf32> -> vector<2x8xf32>
    %c0_6 = arith.constant 0 : index
    %5 = memref.load %arg0[%c0_6] : memref<2xf32, #tpu.memory_space<smem>>
    %6 = vector.broadcast %5 : f32 to vector<2x8xf32>
    %7 = arith.mulf %2, %6 : vector<2x8xf32>
    %c1 = arith.constant 1 : index
    %8 = memref.load %arg0[%c1] : memref<2xf32, #tpu.memory_space<smem>>
    %9 = vector.broadcast %8 : f32 to vector<2x8xf32>
    %10 = arith.mulf %4, %9 : vector<2x8xf32>
    %11 = arith.addf %7, %10 : vector<2x8xf32>
    %c0_7 = arith.constant 0 : index
    %c0_8 = arith.constant 0 : index
    %12 = vector.load %arg4[%c0_7, %c0_8] : memref<1x8xf32, #tpu.memory_space<vmem>>, vector<1x8xf32>
    %13 = vector.broadcast %12 : vector<1x8xf32> to vector<2x8xf32>
    %14 = arith.addf %11, %13 : vector<2x8xf32>
    %c0_9 = arith.constant 0 : index
    %c0_10 = arith.constant 0 : index
    %15 = vector.load %arg5[%c0_9, %c0_10] : memref<2x8xf32, #tpu.memory_space<vmem>>, vector<2x8xf32>
    tpu.vector_store %arg5[%c0_9, %c0_10], %14 {strides = array<i32>} : memref<2x8xf32, #tpu.memory_space<vmem>>, vector<2x8xf32>,
    return
  }
}

</mosaic_0001>

<llo_original>
// kernel: tpu_custom_call.1
$region0: #{tpu_custom_call.1}
  #allocation0 [shape = 'u32[]', space=smem, size = 0x4, offset = 0x4, fixed_abs, tag = 'smem constant byte address 0x4 - core index']
  #allocation1 [shape = 'u32[144,128]{1,0:T(1,128)}', space=vmem, size = 0x12000, scoped, tag = 'internal scratch']
  %s0 = inlined_call_operand.vmem [shape: f32[2], index: 0, kind: input, shape index: {}]
  %s1 = inlined_call_operand.vmem [shape: f32[2,1024], index: 1, kind: input, shape index: {}]
  %s2 = inlined_call_operand.vmem [shape: f32[1024,8], index: 2, kind: input, shape index: {}]
  %s3 = inlined_call_operand.vmem [shape: f32[1024,8], index: 3, kind: input, shape index: {}]
  %s4 = inlined_call_operand.vmem [shape: f32[1,8], index: 4, kind: input, shape index: {}]
  %s5 = inlined_call_operand.hbm [shape: f32[2,8], index: 5, kind: output, shape index: {}]
  %s6 = sld [smem:[#allocation0]]
  $region34: #{tpu_custom_call.1} parent=0
    _
  %s8 = ssub.s32 1, %s6
  %s9 = scalar_select 0, %s8, %s6
  $region1: #{tpu_custom_call.1} parent=0
    #allocation2 [shape = 'u8[512]{0}', space=smem, size = 0x200, scoped, tag = 'input window, operand 0, single buffered']
    #allocation3 [shape = 's32[1]{0}', space=sflag, size = 0x4, scoped, tag = 'scoped memory for tpu_custom_call.1']
    #allocation4 [shape = 's32[1]{0}', space=sflag, size = 0x4, scoped, tag = 'scoped memory for tpu_custom_call.1']
    #allocation5 [shape = 'u8[1024]{0}', space=vmem, size = 0x400, scoped, tag = 'output window, operand 0, single buffered']
    %10 = vsyncpa [#allocation4], 0
    %11 = vsyncpa [#allocation3], 0
    // Predicated region
    $region2: #{tpu_custom_call.1} parent=1 // pred_check
      _
    $region3: #{tpu_custom_call.1} parent=1 // pred_check_branch
      %13 = sbr.rel (0) target = $region5
    $region4: #{tpu_custom_call.1} parent=1 // pred_region
      %s15 = ssub.s32 16, 16
      %16 = vsyncadd [#allocation4], %s15
      %s18 = sshll.u32 %s0, 4
      %s19 = int_to_ptr.vmem [resolvable:$true] %s18
      %21 = dma.vmem_to_smem %s19, 16, [#allocation2], [#allocation4]
    $region5: #{tpu_custom_call.1} parent=1 // pred_fallthru
      _
    // Predicated region
    $region6: #{tpu_custom_call.1} parent=1 // pred_check
      _
    $region7: #{tpu_custom_call.1} parent=1 // pred_check_branch
      %23 = sbr.rel (0) target = $region9
    $region8: #{tpu_custom_call.1} parent=1 // pred_region
      _
    $region9: #{tpu_custom_call.1} parent=1 // pred_fallthru
      _
    // Predicated region
    $region10: #{tpu_custom_call.1} parent=1 // pred_check
      _
    $region11: #{tpu_custom_call.1} parent=1 // pred_check_branch
      %25 = sbr.rel (0) target = $region13
    $region12: #{tpu_custom_call.1} parent=1 // pred_region
      _
    $region13: #{tpu_custom_call.1} parent=1 // pred_fallthru
      _
    // Predicated region
    $region14: #{tpu_custom_call.1} parent=1 // pred_check
      _
    $region15: #{tpu_custom_call.1} parent=1 // pred_check_branch
      %27 = sbr.rel (0) target = $region17
    $region16: #{tpu_custom_call.1} parent=1 // pred_region
      _
    $region17: #{tpu_custom_call.1} parent=1 // pred_fallthru
      _
    // Predicated region
    $region18: #{tpu_custom_call.1} parent=1 // pred_check
      _
    $region19: #{tpu_custom_call.1} parent=1 // pred_check_branch
      %29 = sbr.rel (0) target = $region21
    $region20: #{tpu_custom_call.1} parent=1 // pred_region
      _
    $region21: #{tpu_custom_call.1} parent=1 // pred_fallthru
      _
    // Predicated region
    $region22: #{tpu_custom_call.1} parent=1 // pred_check
      _
    $region23: #{tpu_custom_call.1} parent=1 // pred_check_branch
      %31 = sbr.rel (0) target = $region25
    $region24: #{tpu_custom_call.1} parent=1 // pred_region
      %32 = dma.done [#allocation4], 16
    $region25: #{tpu_custom_call.1} parent=1 // pred_fallthru
      _
    %33 = sfence
    %v34 = vld [vmem:[%s1] sm:$0xff]
    %v35 = vld [vmem:[%s1 + $0x8] sm:$0xff]
    %v36 = vld [vmem:[%s2] sm:$0xff]
    %v37 = vld [vmem:[%s2 + $0x8] sm:$0xff]
    %v38 = vld [vmem:[%s2 + $0x10] sm:$0xff]
    %v39 = vld [vmem:[%s2 + $0x18] sm:$0xff]
    %v40 = vld [vmem:[%s2 + $0x20] sm:$0xff]
    %v41 = vld [vmem:[%s2 + $0x28] sm:$0xff]
    %v42 = vld [vmem:[%s2 + $0x30] sm:$0xff]
    %v43 = vld [vmem:[%s2 + $0x38] sm:$0xff]
    %v44 = vld [vmem:[%s2 + $0x40] sm:$0xff]
    %v45 = vld [vmem:[%s2 + $0x48] sm:$0xff]
    %v46 = vld [vmem:[%s2 + $0x50] sm:$0xff]
    %v47 = vld [vmem:[%s2 + $0x58] sm:$0xff]
    %v48 = vld [vmem:[%s2 + $0x60] sm:$0xff]
    %v49 = vld [vmem:[%s2 + $0x68] sm:$0xff]
    %v50 = vld [vmem:[%s2 + $0x70] sm:$0xff]
    %v51 = vld [vmem:[%s2 + $0x78] sm:$0xff]
    %v52 = vld [vmem:[%s2 + $0x80] sm:$0xff]
    %v53 = vld [vmem:[%s2 + $0x88] sm:$0xff]
    %v54 = vld [vmem:[%s2 + $0x90] sm:$0xff]
    %v55 = vld [vmem:[%s2 + $0x98] sm:$0xff]
    %v56 = vld [vmem:[%s2 + $0xa0] sm:$0xff]
    %v57 = vld [vmem:[%s2 + $0xa8] sm:$0xff]
    %v58 = vld [vmem:[%s2 + $0xb0] sm:$0xff]
    %v59 = vld [vmem:[%s2 + $0xb8] sm:$0xff]
    %v60 = vld [vmem:[%s2 + $0xc0] sm:$0xff]
    %v61 = vld [vmem:[%s2 + $0xc8] sm:$0xff]
    %v62 = vld [vmem:[%s2 + $0xd0] sm:$0xff]
    %v63 = vld [vmem:[%s2 + $0xd8] sm:$0xff]
    %v64 = vld [vmem:[%s2 + $0xe0] sm:$0xff]
    %v65 = vld [vmem:[%s2 + $0xe8] sm:$0xff]
    %v66 = vld [vmem:[%s2 + $0xf0] sm:$0xff]
    %v67 = vld [vmem:[%s2 + $0xf8] sm:$0xff]
    %v68 = vld [vmem:[%s2 + $0x100] sm:$0xff]
    %v69 = vld [vmem:[%s2 + $0x108] sm:$0xff]
    %v70 = vld [vmem:[%s2 + $0x110] sm:$0xff]
    %v71 = vld [vmem:[%s2 + $0x118] sm:$0xff]
    %v72 = vld [vmem:[%s2 + $0x120] sm:$0xff]
    %v73 = vld [vmem:[%s2 + $0x128] sm:$0xff]
    %v74 = vld [vmem:[%s2 + $0x130] sm:$0xff]
    %v75 = vld [vmem:[%s2 + $0x138] sm:$0xff]
    %v76 = vld [vmem:[%s2 + $0x140] sm:$0xff]
    %v77 = vld [vmem:[%s2 + $0x148] sm:$0xff]
    %v78 = vld [vmem:[%s2 + $0x150] sm:$0xff]
    %v79 = vld [vmem:[%s2 + $0x158] sm:$0xff]
    %v80 = vld [vmem:[%s2 + $0x160] sm:$0xff]
    %v81 = vld [vmem:[%s2 + $0x168] sm:$0xff]
    %v82 = vld [vmem:[%s2 + $0x170] sm:$0xff]
    %v83 = vld [vmem:[%s2 + $0x178] sm:$0xff]
    %v84 = vld [vmem:[%s2 + $0x180] sm:$0xff]
    %v85 = vld [vmem:[%s2 + $0x188] sm:$0xff]
    %v86 = vld [vmem:[%s2 + $0x190] sm:$0xff]
    %v87 = vld [vmem:[%s2 + $0x198] sm:$0xff]
    %v88 = vld [vmem:[%s2 + $0x1a0] sm:$0xff]
    %v89 = vld [vmem:[%s2 + $0x1a8] sm:$0xff]
    %v90 = vld [vmem:[%s2 + $0x1b0] sm:$0xff]
    %v91 = vld [vmem:[%s2 + $0x1b8] sm:$0xff]
    %v92 = vld [vmem:[%s2 + $0x1c0] sm:$0xff]
    %v93 = vld [vmem:[%s2 + $0x1c8] sm:$0xff]
    %v94 = vld [vmem:[%s2 + $0x1d0] sm:$0xff]
    %v95 = vld [vmem:[%s2 + $0x1d8] sm:$0xff]
    %v96 = vld [vmem:[%s2 + $0x1e0] sm:$0xff]
    %v97 = vld [vmem:[%s2 + $0x1e8] sm:$0xff]
    %v98 = vld [vmem:[%s2 + $0x1f0] sm:$0xff]
    %v99 = vld [vmem:[%s2 + $0x1f8] sm:$0xff]
    %v100 = vld [vmem:[%s2 + $0x200] sm:$0xff]
    %v101 = vld [vmem:[%s2 + $0x208] sm:$0xff]
    %v102 = vld [vmem:[%s2 + $0x210] sm:$0xff]
    %v103 = vld [vmem:[%s2 + $0x218] sm:$0xff]
    %v104 = vld [vmem:[%s2 + $0x220] sm:$0xff]
    %v105 = vld [vmem:[%s2 + $0x228] sm:$0xff]
    %v106 = vld [vmem:[%s2 + $0x230] sm:$0xff]
    %v107 = vld [vmem:[%s2 + $0x238] sm:$0xff]
    %v108 = vld [vmem:[%s2 + $0x240] sm:$0xff]
    %v109 = vld [vmem:[%s2 + $0x248] sm:$0xff]
    %v110 = vld [vmem:[%s2 + $0x250] sm:$0xff]
    %v111 = vld [vmem:[%s2 + $0x258] sm:$0xff]
    %v112 = vld [vmem:[%s2 + $0x260] sm:$0xff]
    %v113 = vld [vmem:[%s2 + $0x268] sm:$0xff]
    %v114 = vld [vmem:[%s2 + $0x270] sm:$0xff]
    %v115 = vld [vmem:[%s2 + $0x278] sm:$0xff]
    %v116 = vld [vmem:[%s2 + $0x280] sm:$0xff]
    %v117 = vld [vmem:[%s2 + $0x288] sm:$0xff]
    %v118 = vld [vmem:[%s2 + $0x290] sm:$0xff]
    %v119 = vld [vmem:[%s2 + $0x298] sm:$0xff]
    %v120 = vld [vmem:[%s2 + $0x2a0] sm:$0xff]
    %v121 = vld [vmem:[%s2 + $0x2a8] sm:$0xff]
    %v122 = vld [vmem:[%s2 + $0x2b0] sm:$0xff]
    %v123 = vld [vmem:[%s2 + $0x2b8] sm:$0xff]
    %v124 = vld [vmem:[%s2 + $0x2c0] sm:$0xff]
    %v125 = vld [vmem:[%s2 + $0x2c8] sm:$0xff]
    %v126 = vld [vmem:[%s2 + $0x2d0] sm:$0xff]
    %v127 = vld [vmem:[%s2 + $0x2d8] sm:$0xff]
    %v128 = vld [vmem:[%s2 + $0x2e0] sm:$0xff]
    %v129 = vld [vmem:[%s2 + $0x2e8] sm:$0xff]
    %v130 = vld [vmem:[%s2 + $0x2f0] sm:$0xff]
    %v131 = vld [vmem:[%s2 + $0x2f8] sm:$0xff]
    %v132 = vld [vmem:[%s2 + $0x300] sm:$0xff]
    %v133 = vld [vmem:[%s2 + $0x308] sm:$0xff]
    %v134 = vld [vmem:[%s2 + $0x310] sm:$0xff]
    %v135 = vld [vmem:[%s2 + $0x318] sm:$0xff]
    %v136 = vld [vmem:[%s2 + $0x320] sm:$0xff]
    %v137 = vld [vmem:[%s2 + $0x328] sm:$0xff]
    %v138 = vld [vmem:[%s2 + $0x330] sm:$0xff]
    %v139 = vld [vmem:[%s2 + $0x338] sm:$0xff]
    %v140 = vld [vmem:[%s2 + $0x340] sm:$0xff]
    %v141 = vld [vmem:[%s2 + $0x348] sm:$0xff]
    %v142 = vld [vmem:[%s2 + $0x350] sm:$0xff]
    %v143 = vld [vmem:[%s2 + $0x358] sm:$0xff]
    %v144 = vld [vmem:[%s2 + $0x360] sm:$0xff]
    %v145 = vld [vmem:[%s2 + $0x368] sm:$0xff]
    %v146 = vld [vmem:[%s2 + $0x370] sm:$0xff]
    %v147 = vld [vmem:[%s2 + $0x378] sm:$0xff]
    %v148 = vld [vmem:[%s2 + $0x380] sm:$0xff]
    %v149 = vld [vmem:[%s2 + $0x388] sm:$0xff]
    %v150 = vld [vmem:[%s2 + $0x390] sm:$0xff]
    %v151 = vld [vmem:[%s2 + $0x398] sm:$0xff]
    %v152 = vld [vmem:[%s2 + $0x3a0] sm:$0xff]
    %v153 = vld [vmem:[%s2 + $0x3a8] sm:$0xff]
    %v154 = vld [vmem:[%s2 + $0x3b0] sm:$0xff]
    %v155 = vld [vmem:[%s2 + $0x3b8] sm:$0xff]
    %v156 = vld [vmem:[%s2 + $0x3c0] sm:$0xff]
    %v157 = vld [vmem:[%s2 + $0x3c8] sm:$0xff]
    %v158 = vld [vmem:[%s2 + $0x3d0] sm:$0xff]
    %v159 = vld [vmem:[%s2 + $0x3d8] sm:$0xff]
    %v160 = vld [vmem:[%s2 + $0x3e0] sm:$0xff]
    %v161 = vld [vmem:[%s2 + $0x3e8] sm:$0xff]
    %v162 = vld [vmem:[%s2 + $0x3f0] sm:$0xff]
    %v163 = vld [vmem:[%s2 + $0x3f8] sm:$0xff]
    %v166 = vcombine.high %v34, %v34
    %v168 = vunpack.c.l.s4 1983009808
    %v169 = vunpack.c.0.s8 %v168
    %v170 = vlaneseq
    %v171 = vshrl.u32 %v170, 7
    %v172 = vsub.s32 %v169, %v171
    %v173 = vrot.slane %v34, %v172
    %v175 = vunpack.c.l.s4 1983009808
    %v176 = vunpack.c.0.s8 %v175
    %v177 = vlaneseq
    %v178 = vshrl.u32 %v177, 7
    %v179 = vsub.s32 %v176, %v178
    %v180 = vrot.slane %v166, %v179
    %v181 = vcombine.high %v173, %v173
    %v182 = vcombine.high %v180, %v180
    %v183 = vcombine.high %v35, %v35
    %v185 = vunpack.c.l.s4 1983009808
    %v186 = vunpack.c.0.s8 %v185
    %v187 = vlaneseq
    %v188 = vshrl.u32 %v187, 7
    %v189 = vsub.s32 %v186, %v188
    %v190 = vrot.slane %v35, %v189
    %v192 = vunpack.c.l.s4 1983009808
    %v193 = vunpack.c.0.s8 %v192
    %v194 = vlaneseq
    %v195 = vshrl.u32 %v194, 7
    %v196 = vsub.s32 %v193, %v195
    %v197 = vrot.slane %v183, %v196
    %v198 = vcombine.high %v190, %v190
    %v199 = vcombine.high %v197, %v197
    %208 = vmatprep.subr.mxu0 0.0
    %209 = vmatpush1.msra.mxu0 %v36
    %210 = vmatprep.subr.mxu0 0.0
    %211 = vmatpush1.msra.mxu0 %v37
    %212 = vmatprep.subr.mxu0 0.0
    %213 = vmatpush1.msra.mxu0 %v38
    %214 = vmatprep.subr.mxu0 0.0
    %215 = vmatpush1.msra.mxu0 %v39
    %216 = vmatprep.subr.mxu0 0.0
    %217 = vmatpush1.msra.mxu0 %v40
    %218 = vmatprep.subr.mxu0 0.0
    %219 = vmatpush1.msra.mxu0 %v41
    %220 = vmatprep.subr.mxu0 0.0
    %221 = vmatpush1.msra.mxu0 %v42
    %222 = vmatprep.subr.mxu0 0.0
    %223 = vmatpush1.msra.mxu0 %v43
    %224 = vmatprep.subr.mxu0 0.0
    %225 = vmatpush1.msra.mxu0 %v44
    %226 = vmatprep.subr.mxu0 0.0
    %227 = vmatpush1.msra.mxu0 %v45
    %228 = vmatprep.subr.mxu0 0.0
    %229 = vmatpush1.msra.mxu0 %v46
    %230 = vmatprep.subr.mxu0 0.0
    %231 = vmatpush1.msra.mxu0 %v47
    %232 = vmatprep.subr.mxu0 0.0
    %233 = vmatpush1.msra.mxu0 %v48
    %234 = vmatprep.subr.mxu0 0.0
    %235 = vmatpush1.msra.mxu0 %v49
    %236 = vmatprep.subr.mxu0 0.0
    %237 = vmatpush1.msra.mxu0 %v50
    %238 = vmatprep.subr.mxu0 0.0
    %239 = vmatpush1.msra.mxu0 %v51
    %240 = vmatprep.subr.mxu0 0.0
    %241 = vmatpush1.msra.mxu0 %v52
    %242 = vmatprep.subr.mxu0 0.0
    %243 = vmatpush1.msra.mxu0 %v53
    %244 = vmatprep.subr.mxu0 0.0
    %245 = vmatpush1.msra.mxu0 %v54
    %246 = vmatprep.subr.mxu0 0.0
    %247 = vmatpush1.msra.mxu0 %v55
    %248 = vmatprep.subr.mxu0 0.0
    %249 = vmatpush1.msra.mxu0 %v56
    %250 = vmatprep.subr.mxu0 0.0
    %251 = vmatpush1.msra.mxu0 %v57
    %252 = vmatprep.subr.mxu0 0.0
    %253 = vmatpush1.msra.mxu0 %v58
    %254 = vmatprep.subr.mxu0 0.0
    %255 = vmatpush1.msra.mxu0 %v59
    %256 = vmatprep.subr.mxu0 0.0
    %257 = vmatpush1.msra.mxu0 %v60
    %258 = vmatprep.subr.mxu0 0.0
    %259 = vmatpush1.msra.mxu0 %v61
    %260 = vmatprep.subr.mxu0 0.0
    %261 = vmatpush1.msra.mxu0 %v62
    %262 = vmatprep.subr.mxu0 0.0
    %263 = vmatpush1.msra.mxu0 %v63
    %264 = vmatprep.subr.mxu0 0.0
    %265 = vmatpush1.msra.mxu0 %v64
    %266 = vmatprep.subr.mxu0 0.0
    %267 = vmatpush1.msra.mxu0 %v65
    %268 = vmatprep.subr.mxu0 0.0
    %269 = vmatpush1.msra.mxu0 %v66
    %270 = vmatprep.subr.mxu0 0.0
    %271 = vmatpush1.msra.mxu0 %v67
    %272 = vmatprep.mubr.f32.mxu0 %v181
    %273 = vmatmul.mubr.f32.gmra.mrb[0].mxu0 %v173
    %v274 = vpop.f32.mrb[0].mxu0
    %v275 = vadd.f32 0.0, %v274
    %v276 = vpop.f32.mrb[0].mxu0
    %277 = vdwg.mxu0
    %278 = vmatprep.subr.mxu0 0.0
    %279 = vmatpush1.msra.mxu0 %v68
    %280 = vmatprep.subr.mxu0 0.0
    %281 = vmatpush1.msra.mxu0 %v69
    %282 = vmatprep.subr.mxu0 0.0
    %283 = vmatpush1.msra.mxu0 %v70
    %284 = vmatprep.subr.mxu0 0.0
    %285 = vmatpush1.msra.mxu0 %v71
    %286 = vmatprep.subr.mxu0 0.0
    %287 = vmatpush1.msra.mxu0 %v72
    %288 = vmatprep.subr.mxu0 0.0
    %289 = vmatpush1.msra.mxu0 %v73
    %290 = vmatprep.subr.mxu0 0.0
    %291 = vmatpush1.msra.mxu0 %v74
    %292 = vmatprep.subr.mxu0 0.0
    %293 = vmatpush1.msra.mxu0 %v75
    %294 = vmatprep.subr.mxu0 0.0
    %295 = vmatpush1.msra.mxu0 %v76
    %296 = vmatprep.subr.mxu0 0.0
    %297 = vmatpush1.msra.mxu0 %v77
    %298 = vmatprep.subr.mxu0 0.0
    %299 = vmatpush1.msra.mxu0 %v78
    %300 = vmatprep.subr.mxu0 0.0
    %301 = vmatpush1.msra.mxu0 %v79
    %302 = vmatprep.subr.mxu0 0.0
    %303 = vmatpush1.msra.mxu0 %v80
    %304 = vmatprep.subr.mxu0 0.0
    %305 = vmatpush1.msra.mxu0 %v81
    %306 = vmatprep.subr.mxu0 0.0
    %307 = vmatpush1.msra.mxu0 %v82
    %308 = vmatprep.subr.mxu0 0.0
    %309 = vmatpush1.msra.mxu0 %v83
    %310 = vmatprep.subr.mxu0 0.0
    %311 = vmatpush1.msra.mxu0 %v84
    %312 = vmatprep.subr.mxu0 0.0
    %313 = vmatpush1.msra.mxu0 %v85
    %314 = vmatprep.subr.mxu0 0.0
    %315 = vmatpush1.msra.mxu0 %v86
    %316 = vmatprep.subr.mxu0 0.0
    %317 = vmatpush1.msra.mxu0 %v87
    %318 = vmatprep.subr.mxu0 0.0
    %319 = vmatpush1.msra.mxu0 %v88
    %320 = vmatprep.subr.mxu0 0.0
    %321 = vmatpush1.msra.mxu0 %v89
    %322 = vmatprep.subr.mxu0 0.0
    %323 = vmatpush1.msra.mxu0 %v90
    %324 = vmatprep.subr.mxu0 0.0
    %325 = vmatpush1.msra.mxu0 %v91
    %326 = vmatprep.subr.mxu0 0.0
    %327 = vmatpush1.msra.mxu0 %v92
    %328 = vmatprep.subr.mxu0 0.0
    %329 = vmatpush1.msra.mxu0 %v93
    %330 = vmatprep.subr.mxu0 0.0
    %331 = vmatpush1.msra.mxu0 %v94
    %332 = vmatprep.subr.mxu0 0.0
    %333 = vmatpush1.msra.mxu0 %v95
    %334 = vmatprep.subr.mxu0 0.0
    %335 = vmatpush1.msra.mxu0 %v96
    %336 = vmatprep.subr.mxu0 0.0
    %337 = vmatpush1.msra.mxu0 %v97
    %338 = vmatprep.subr.mxu0 0.0
    %339 = vmatpush1.msra.mxu0 %v98
    %340 = vmatprep.subr.mxu0 0.0
    %341 = vmatpush1.msra.mxu0 %v99
    %342 = vmatprep.mubr.f32.mxu0 %v182
    %343 = vmatmul.mubr.f32.gmra.mrb[0].mxu0 %v180
    %v344 = vpop.f32.mrb[0].mxu0
    %v345 = vadd.f32 %v275, %v344
    %v346 = vpop.f32.mrb[0].mxu0
    %347 = vdwg.mxu0
    %348 = vmatprep.subr.mxu0 0.0
    %349 = vmatpush1.msra.mxu0 %v100
    %350 = vmatprep.subr.mxu0 0.0
    %351 = vmatpush1.msra.mxu0 %v101
    %352 = vmatprep.subr.mxu0 0.0
    %353 = vmatpush1.msra.mxu0 %v102
    %354 = vmatprep.subr.mxu0 0.0
    %355 = vmatpush1.msra.mxu0 %v103
    %356 = vmatprep.subr.mxu0 0.0
    %357 = vmatpush1.msra.mxu0 %v104
    %358 = vmatprep.subr.mxu0 0.0
    %359 = vmatpush1.msra.mxu0 %v105
    %360 = vmatprep.subr.mxu0 0.0
    %361 = vmatpush1.msra.mxu0 %v106
    %362 = vmatprep.subr.mxu0 0.0
    %363 = vmatpush1.msra.mxu0 %v107
    %364 = vmatprep.subr.mxu0 0.0
    %365 = vmatpush1.msra.mxu0 %v108
    %366 = vmatprep.subr.mxu0 0.0
    %367 = vmatpush1.msra.mxu0 %v109
    %368 = vmatprep.subr.mxu0 0.0
    %369 = vmatpush1.msra.mxu0 %v110
    %370 = vmatprep.subr.mxu0 0.0
    %371 = vmatpush1.msra.mxu0 %v111
    %372 = vmatprep.subr.mxu0 0.0
    %373 = vmatpush1.msra.mxu0 %v112
    %374 = vmatprep.subr.mxu0 0.0
    %375 = vmatpush1.msra.mxu0 %v113
    %376 = vmatprep.subr.mxu0 0.0
    %377 = vmatpush1.msra.mxu0 %v114
    %378 = vmatprep.subr.mxu0 0.0
    %379 = vmatpush1.msra.mxu0 %v115
    %380 = vmatprep.subr.mxu0 0.0
    %381 = vmatpush1.msra.mxu0 %v116
    %382 = vmatprep.subr.mxu0 0.0
    %383 = vmatpush1.msra.mxu0 %v117
    %384 = vmatprep.subr.mxu0 0.0
    %385 = vmatpush1.msra.mxu0 %v118
    %386 = vmatprep.subr.mxu0 0.0
    %387 = vmatpush1.msra.mxu0 %v119
    %388 = vmatprep.subr.mxu0 0.0
    %389 = vmatpush1.msra.mxu0 %v120
    %390 = vmatprep.subr.mxu0 0.0
    %391 = vmatpush1.msra.mxu0 %v121
    %392 = vmatprep.subr.mxu0 0.0
    %393 = vmatpush1.msra.mxu0 %v122
    %394 = vmatprep.subr.mxu0 0.0
    %395 = vmatpush1.msra.mxu0 %v123
    %396 = vmatprep.subr.mxu0 0.0
    %397 = vmatpush1.msra.mxu0 %v124
    %398 = vmatprep.subr.mxu0 0.0
    %399 = vmatpush1.msra.mxu0 %v125
    %400 = vmatprep.subr.mxu0 0.0
    %401 = vmatpush1.msra.mxu0 %v126
    %402 = vmatprep.subr.mxu0 0.0
    %403 = vmatpush1.msra.mxu0 %v127
    %404 = vmatprep.subr.mxu0 0.0
    %405 = vmatpush1.msra.mxu0 %v128
    %406 = vmatprep.subr.mxu0 0.0
    %407 = vmatpush1.msra.mxu0 %v129
    %408 = vmatprep.subr.mxu0 0.0
    %409 = vmatpush1.msra.mxu0 %v130
    %410 = vmatprep.subr.mxu0 0.0
    %411 = vmatpush1.msra.mxu0 %v131
    %412 = vmatprep.mubr.f32.mxu0 %v198
    %413 = vmatmul.mubr.f32.gmra.mrb[0].mxu0 %v190
    %v414 = vpop.f32.mrb[0].mxu0
    %v415 = vadd.f32 %v345, %v414
    %v416 = vpop.f32.mrb[0].mxu0
    %417 = vdwg.mxu0
    %418 = vmatprep.subr.mxu0 0.0
    %419 = vmatpush1.msra.mxu0 %v132
    %420 = vmatprep.subr.mxu0 0.0
    %421 = vmatpush1.msra.mxu0 %v133
    %422 = vmatprep.subr.mxu0 0.0
    %423 = vmatpush1.msra.mxu0 %v134
    %424 = vmatprep.subr.mxu0 0.0
    %425 = vmatpush1.msra.mxu0 %v135
    %426 = vmatprep.subr.mxu0 0.0
    %427 = vmatpush1.msra.mxu0 %v136
    %428 = vmatprep.subr.mxu0 0.0
    %429 = vmatpush1.msra.mxu0 %v137
    %430 = vmatprep.subr.mxu0 0.0
    %431 = vmatpush1.msra.mxu0 %v138
    %432 = vmatprep.subr.mxu0 0.0
    %433 = vmatpush1.msra.mxu0 %v139
    %434 = vmatprep.subr.mxu0 0.0
    %435 = vmatpush1.msra.mxu0 %v140
    %436 = vmatprep.subr.mxu0 0.0
    %437 = vmatpush1.msra.mxu0 %v141
    %438 = vmatprep.subr.mxu0 0.0
    %439 = vmatpush1.msra.mxu0 %v142
    %440 = vmatprep.subr.mxu0 0.0
    %441 = vmatpush1.msra.mxu0 %v143
    %442 = vmatprep.subr.mxu0 0.0
    %443 = vmatpush1.msra.mxu0 %v144
    %444 = vmatprep.subr.mxu0 0.0
    %445 = vmatpush1.msra.mxu0 %v145
    %446 = vmatprep.subr.mxu0 0.0
    %447 = vmatpush1.msra.mxu0 %v146
    %448 = vmatprep.subr.mxu0 0.0
    %449 = vmatpush1.msra.mxu0 %v147
    %450 = vmatprep.subr.mxu0 0.0
    %451 = vmatpush1.msra.mxu0 %v148
    %452 = vmatprep.subr.mxu0 0.0
    %453 = vmatpush1.msra.mxu0 %v149
    %454 = vmatprep.subr.mxu0 0.0
    %455 = vmatpush1.msra.mxu0 %v150
    %456 = vmatprep.subr.mxu0 0.0
    %457 = vmatpush1.msra.mxu0 %v151
    %458 = vmatprep.subr.mxu0 0.0
    %459 = vmatpush1.msra.mxu0 %v152
    %460 = vmatprep.subr.mxu0 0.0
    %461 = vmatpush1.msra.mxu0 %v153
    %462 = vmatprep.subr.mxu0 0.0
    %463 = vmatpush1.msra.mxu0 %v154
    %464 = vmatprep.subr.mxu0 0.0
    %465 = vmatpush1.msra.mxu0 %v155
    %466 = vmatprep.subr.mxu0 0.0
    %467 = vmatpush1.msra.mxu0 %v156
    %468 = vmatprep.subr.mxu0 0.0
    %469 = vmatpush1.msra.mxu0 %v157
    %470 = vmatprep.subr.mxu0 0.0
    %471 = vmatpush1.msra.mxu0 %v158
    %472 = vmatprep.subr.mxu0 0.0
    %473 = vmatpush1.msra.mxu0 %v159
    %474 = vmatprep.subr.mxu0 0.0
    %475 = vmatpush1.msra.mxu0 %v160
    %476 = vmatprep.subr.mxu0 0.0
    %477 = vmatpush1.msra.mxu0 %v161
    %478 = vmatprep.subr.mxu0 0.0
    %479 = vmatpush1.msra.mxu0 %v162
    %480 = vmatprep.subr.mxu0 0.0
    %481 = vmatpush1.msra.mxu0 %v163
    %482 = vmatprep.mubr.f32.mxu0 %v199
    %483 = vmatmul.mubr.f32.gmra.mrb[0].mxu0 %v197
    %v484 = vpop.f32.mrb[0].mxu0
    %v485 = vadd.f32 %v415, %v484
    %v486 = vpop.f32.mrb[0].mxu0
    %487 = vdwg.mxu0
    %v488 = vld [vmem:[%s3] sm:$0xff]
    %v489 = vld [vmem:[%s3 + $0x8] sm:$0xff]
    %v490 = vld [vmem:[%s3 + $0x10] sm:$0xff]
    %v491 = vld [vmem:[%s3 + $0x18] sm:$0xff]
    %v492 = vld [vmem:[%s3 + $0x20] sm:$0xff]
    %v493 = vld [vmem:[%s3 + $0x28] sm:$0xff]
    %v494 = vld [vmem:[%s3 + $0x30] sm:$0xff]
    %v495 = vld [vmem:[%s3 + $0x38] sm:$0xff]
    %v496 = vld [vmem:[%s3 + $0x40] sm:$0xff]
    %v497 = vld [vmem:[%s3 + $0x48] sm:$0xff]
    %v498 = vld [vmem:[%s3 + $0x50] sm:$0xff]
    %v499 = vld [vmem:[%s3 + $0x58] sm:$0xff]
    %v500 = vld [vmem:[%s3 + $0x60] sm:$0xff]
    %v501 = vld [vmem:[%s3 + $0x68] sm:$0xff]
    %v502 = vld [vmem:[%s3 + $0x70] sm:$0xff]
    %v503 = vld [vmem:[%s3 + $0x78] sm:$0xff]
    %v504 = vld [vmem:[%s3 + $0x80] sm:$0xff]
    %v505 = vld [vmem:[%s3 + $0x88] sm:$0xff]
    %v506 = vld [vmem:[%s3 + $0x90] sm:$0xff]
    %v507 = vld [vmem:[%s3 + $0x98] sm:$0xff]
    %v508 = vld [vmem:[%s3 + $0xa0] sm:$0xff]
    %v509 = vld [vmem:[%s3 + $0xa8] sm:$0xff]
    %v510 = vld [vmem:[%s3 + $0xb0] sm:$0xff]
    %v511 = vld [vmem:[%s3 + $0xb8] sm:$0xff]
    %v512 = vld [vmem:[%s3 + $0xc0] sm:$0xff]
    %v513 = vld [vmem:[%s3 + $0xc8] sm:$0xff]
    %v514 = vld [vmem:[%s3 + $0xd0] sm:$0xff]
    %v515 = vld [vmem:[%s3 + $0xd8] sm:$0xff]
    %v516 = vld [vmem:[%s3 + $0xe0] sm:$0xff]
    %v517 = vld [vmem:[%s3 + $0xe8] sm:$0xff]
    %v518 = vld [vmem:[%s3 + $0xf0] sm:$0xff]
    %v519 = vld [vmem:[%s3 + $0xf8] sm:$0xff]
    %v520 = vld [vmem:[%s3 + $0x100] sm:$0xff]
    %v521 = vld [vmem:[%s3 + $0x108] sm:$0xff]
    %v522 = vld [vmem:[%s3 + $0x110] sm:$0xff]
    %v523 = vld [vmem:[%s3 + $0x118] sm:$0xff]
    %v524 = vld [vmem:[%s3 + $0x120] sm:$0xff]
    %v525 = vld [vmem:[%s3 + $0x128] sm:$0xff]
    %v526 = vld [vmem:[%s3 + $0x130] sm:$0xff]
    %v527 = vld [vmem:[%s3 + $0x138] sm:$0xff]
    %v528 = vld [vmem:[%s3 + $0x140] sm:$0xff]
    %v529 = vld [vmem:[%s3 + $0x148] sm:$0xff]
    %v530 = vld [vmem:[%s3 + $0x150] sm:$0xff]
    %v531 = vld [vmem:[%s3 + $0x158] sm:$0xff]
    %v532 = vld [vmem:[%s3 + $0x160] sm:$0xff]
    %v533 = vld [vmem:[%s3 + $0x168] sm:$0xff]
    %v534 = vld [vmem:[%s3 + $0x170] sm:$0xff]
    %v535 = vld [vmem:[%s3 + $0x178] sm:$0xff]
    %v536 = vld [vmem:[%s3 + $0x180] sm:$0xff]
    %v537 = vld [vmem:[%s3 + $0x188] sm:$0xff]
    %v538 = vld [vmem:[%s3 + $0x190] sm:$0xff]
    %v539 = vld [vmem:[%s3 + $0x198] sm:$0xff]
    %v540 = vld [vmem:[%s3 + $0x1a0] sm:$0xff]
    %v541 = vld [vmem:[%s3 + $0x1a8] sm:$0xff]
    %v542 = vld [vmem:[%s3 + $0x1b0] sm:$0xff]
    %v543 = vld [vmem:[%s3 + $0x1b8] sm:$0xff]
    %v544 = vld [vmem:[%s3 + $0x1c0] sm:$0xff]
    %v545 = vld [vmem:[%s3 + $0x1c8] sm:$0xff]
    %v546 = vld [vmem:[%s3 + $0x1d0] sm:$0xff]
    %v547 = vld [vmem:[%s3 + $0x1d8] sm:$0xff]
    %v548 = vld [vmem:[%s3 + $0x1e0] sm:$0xff]
    %v549 = vld [vmem:[%s3 + $0x1e8] sm:$0xff]
    %v550 = vld [vmem:[%s3 + $0x1f0] sm:$0xff]
    %v551 = vld [vmem:[%s3 + $0x1f8] sm:$0xff]
    %v552 = vld [vmem:[%s3 + $0x200] sm:$0xff]
    %v553 = vld [vmem:[%s3 + $0x208] sm:$0xff]
    %v554 = vld [vmem:[%s3 + $0x210] sm:$0xff]
    %v555 = vld [vmem:[%s3 + $0x218] sm:$0xff]
    %v556 = vld [vmem:[%s3 + $0x220] sm:$0xff]
    %v557 = vld [vmem:[%s3 + $0x228] sm:$0xff]
    %v558 = vld [vmem:[%s3 + $0x230] sm:$0xff]
    %v559 = vld [vmem:[%s3 + $0x238] sm:$0xff]
    %v560 = vld [vmem:[%s3 + $0x240] sm:$0xff]
    %v561 = vld [vmem:[%s3 + $0x248] sm:$0xff]
    %v562 = vld [vmem:[%s3 + $0x250] sm:$0xff]
    %v563 = vld [vmem:[%s3 + $0x258] sm:$0xff]
    %v564 = vld [vmem:[%s3 + $0x260] sm:$0xff]
    %v565 = vld [vmem:[%s3 + $0x268] sm:$0xff]
    %v566 = vld [vmem:[%s3 + $0x270] sm:$0xff]
    %v567 = vld [vmem:[%s3 + $0x278] sm:$0xff]
    %v568 = vld [vmem:[%s3 + $0x280] sm:$0xff]
    %v569 = vld [vmem:[%s3 + $0x288] sm:$0xff]
    %v570 = vld [vmem:[%s3 + $0x290] sm:$0xff]
    %v571 = vld [vmem:[%s3 + $0x298] sm:$0xff]
    %v572 = vld [vmem:[%s3 + $0x2a0] sm:$0xff]
    %v573 = vld [vmem:[%s3 + $0x2a8] sm:$0xff]
    %v574 = vld [vmem:[%s3 + $0x2b0] sm:$0xff]
    %v575 = vld [vmem:[%s3 + $0x2b8] sm:$0xff]
    %v576 = vld [vmem:[%s3 + $0x2c0] sm:$0xff]
    %v577 = vld [vmem:[%s3 + $0x2c8] sm:$0xff]
    %v578 = vld [vmem:[%s3 + $0x2d0] sm:$0xff]
    %v579 = vld [vmem:[%s3 + $0x2d8] sm:$0xff]
    %v580 = vld [vmem:[%s3 + $0x2e0] sm:$0xff]
    %v581 = vld [vmem:[%s3 + $0x2e8] sm:$0xff]
    %v582 = vld [vmem:[%s3 + $0x2f0] sm:$0xff]
    %v583 = vld [vmem:[%s3 + $0x2f8] sm:$0xff]
    %v584 = vld [vmem:[%s3 + $0x300] sm:$0xff]
    %v585 = vld [vmem:[%s3 + $0x308] sm:$0xff]
    %v586 = vld [vmem:[%s3 + $0x310] sm:$0xff]
    %v587 = vld [vmem:[%s3 + $0x318] sm:$0xff]
    %v588 = vld [vmem:[%s3 + $0x320] sm:$0xff]
    %v589 = vld [vmem:[%s3 + $0x328] sm:$0xff]
    %v590 = vld [vmem:[%s3 + $0x330] sm:$0xff]
    %v591 = vld [vmem:[%s3 + $0x338] sm:$0xff]
    %v592 = vld [vmem:[%s3 + $0x340] sm:$0xff]
    %v593 = vld [vmem:[%s3 + $0x348] sm:$0xff]
    %v594 = vld [vmem:[%s3 + $0x350] sm:$0xff]
    %v595 = vld [vmem:[%s3 + $0x358] sm:$0xff]
    %v596 = vld [vmem:[%s3 + $0x360] sm:$0xff]
    %v597 = vld [vmem:[%s3 + $0x368] sm:$0xff]
    %v598 = vld [vmem:[%s3 + $0x370] sm:$0xff]
    %v599 = vld [vmem:[%s3 + $0x378] sm:$0xff]
    %v600 = vld [vmem:[%s3 + $0x380] sm:$0xff]
    %v601 = vld [vmem:[%s3 + $0x388] sm:$0xff]
    %v602 = vld [vmem:[%s3 + $0x390] sm:$0xff]
    %v603 = vld [vmem:[%s3 + $0x398] sm:$0xff]
    %v604 = vld [vmem:[%s3 + $0x3a0] sm:$0xff]
    %v605 = vld [vmem:[%s3 + $0x3a8] sm:$0xff]
    %v606 = vld [vmem:[%s3 + $0x3b0] sm:$0xff]
    %v607 = vld [vmem:[%s3 + $0x3b8] sm:$0xff]
    %v608 = vld [vmem:[%s3 + $0x3c0] sm:$0xff]
    %v609 = vld [vmem:[%s3 + $0x3c8] sm:$0xff]
    %v610 = vld [vmem:[%s3 + $0x3d0] sm:$0xff]
    %v611 = vld [vmem:[%s3 + $0x3d8] sm:$0xff]
    %v612 = vld [vmem:[%s3 + $0x3e0] sm:$0xff]
    %v613 = vld [vmem:[%s3 + $0x3e8] sm:$0xff]
    %v614 = vld [vmem:[%s3 + $0x3f0] sm:$0xff]
    %v615 = vld [vmem:[%s3 + $0x3f8] sm:$0xff]
    %616 = vmatprep.subr.mxu0 0.0
    %617 = vmatpush1.msra.mxu0 %v488
    %618 = vmatprep.subr.mxu0 0.0
    %619 = vmatpush1.msra.mxu0 %v489
    %620 = vmatprep.subr.mxu0 0.0
    %621 = vmatpush1.msra.mxu0 %v490
    %622 = vmatprep.subr.mxu0 0.0
    %623 = vmatpush1.msra.mxu0 %v491
    %624 = vmatprep.subr.mxu0 0.0
    %625 = vmatpush1.msra.mxu0 %v492
    %626 = vmatprep.subr.mxu0 0.0
    %627 = vmatpush1.msra.mxu0 %v493
    %628 = vmatprep.subr.mxu0 0.0
    %629 = vmatpush1.msra.mxu0 %v494
    %630 = vmatprep.subr.mxu0 0.0
    %631 = vmatpush1.msra.mxu0 %v495
    %632 = vmatprep.subr.mxu0 0.0
    %633 = vmatpush1.msra.mxu0 %v496
    %634 = vmatprep.subr.mxu0 0.0
    %635 = vmatpush1.msra.mxu0 %v497
    %636 = vmatprep.subr.mxu0 0.0
    %637 = vmatpush1.msra.mxu0 %v498
    %638 = vmatprep.subr.mxu0 0.0
    %639 = vmatpush1.msra.mxu0 %v499
    %640 = vmatprep.subr.mxu0 0.0
    %641 = vmatpush1.msra.mxu0 %v500
    %642 = vmatprep.subr.mxu0 0.0
    %643 = vmatpush1.msra.mxu0 %v501
    %644 = vmatprep.subr.mxu0 0.0
    %645 = vmatpush1.msra.mxu0 %v502
    %646 = vmatprep.subr.mxu0 0.0
    %647 = vmatpush1.msra.mxu0 %v503
    %648 = vmatprep.subr.mxu0 0.0
    %649 = vmatpush1.msra.mxu0 %v504
    %650 = vmatprep.subr.mxu0 0.0
    %651 = vmatpush1.msra.mxu0 %v505
    %652 = vmatprep.subr.mxu0 0.0
    %653 = vmatpush1.msra.mxu0 %v506
    %654 = vmatprep.subr.mxu0 0.0
    %655 = vmatpush1.msra.mxu0 %v507
    %656 = vmatprep.subr.mxu0 0.0
    %657 = vmatpush1.msra.mxu0 %v508
    %658 = vmatprep.subr.mxu0 0.0
    %659 = vmatpush1.msra.mxu0 %v509
    %660 = vmatprep.subr.mxu0 0.0
    %661 = vmatpush1.msra.mxu0 %v510
    %662 = vmatprep.subr.mxu0 0.0
    %663 = vmatpush1.msra.mxu0 %v511
    %664 = vmatprep.subr.mxu0 0.0
    %665 = vmatpush1.msra.mxu0 %v512
    %666 = vmatprep.subr.mxu0 0.0
    %667 = vmatpush1.msra.mxu0 %v513
    %668 = vmatprep.subr.mxu0 0.0
    %669 = vmatpush1.msra.mxu0 %v514
    %670 = vmatprep.subr.mxu0 0.0
    %671 = vmatpush1.msra.mxu0 %v515
    %672 = vmatprep.subr.mxu0 0.0
    %673 = vmatpush1.msra.mxu0 %v516
    %674 = vmatprep.subr.mxu0 0.0
    %675 = vmatpush1.msra.mxu0 %v517
    %676 = vmatprep.subr.mxu0 0.0
    %677 = vmatpush1.msra.mxu0 %v518
    %678 = vmatprep.subr.mxu0 0.0
    %679 = vmatpush1.msra.mxu0 %v519
    %680 = vmatprep.mubr.f32.mxu0 %v181
    %681 = vmatmul.mubr.f32.gmra.mrb[0].mxu0 %v173
    %v682 = vpop.f32.mrb[0].mxu0
    %v683 = vadd.f32 0.0, %v682
    %v684 = vpop.f32.mrb[0].mxu0
    %685 = vdwg.mxu0
    %686 = vmatprep.subr.mxu0 0.0
    %687 = vmatpush1.msra.mxu0 %v520
    %688 = vmatprep.subr.mxu0 0.0
    %689 = vmatpush1.msra.mxu0 %v521
    %690 = vmatprep.subr.mxu0 0.0
    %691 = vmatpush1.msra.mxu0 %v522
    %692 = vmatprep.subr.mxu0 0.0
    %693 = vmatpush1.msra.mxu0 %v523
    %694 = vmatprep.subr.mxu0 0.0
    %695 = vmatpush1.msra.mxu0 %v524
    %696 = vmatprep.subr.mxu0 0.0
    %697 = vmatpush1.msra.mxu0 %v525
    %698 = vmatprep.subr.mxu0 0.0
    %699 = vmatpush1.msra.mxu0 %v526
    %700 = vmatprep.subr.mxu0 0.0
    %701 = vmatpush1.msra.mxu0 %v527
    %702 = vmatprep.subr.mxu0 0.0
    %703 = vmatpush1.msra.mxu0 %v528
    %704 = vmatprep.subr.mxu0 0.0
    %705 = vmatpush1.msra.mxu0 %v529
    %706 = vmatprep.subr.mxu0 0.0
    %707 = vmatpush1.msra.mxu0 %v530
    %708 = vmatprep.subr.mxu0 0.0
    %709 = vmatpush1.msra.mxu0 %v531
    %710 = vmatprep.subr.mxu0 0.0
    %711 = vmatpush1.msra.mxu0 %v532
    %712 = vmatprep.subr.mxu0 0.0
    %713 = vmatpush1.msra.mxu0 %v533
    %714 = vmatprep.subr.mxu0 0.0
    %715 = vmatpush1.msra.mxu0 %v534
    %716 = vmatprep.subr.mxu0 0.0
    %717 = vmatpush1.msra.mxu0 %v535
    %718 = vmatprep.subr.mxu0 0.0
    %719 = vmatpush1.msra.mxu0 %v536
    %720 = vmatprep.subr.mxu0 0.0
    %721 = vmatpush1.msra.mxu0 %v537
    %722 = vmatprep.subr.mxu0 0.0
    %723 = vmatpush1.msra.mxu0 %v538
    %724 = vmatprep.subr.mxu0 0.0
    %725 = vmatpush1.msra.mxu0 %v539
    %726 = vmatprep.subr.mxu0 0.0
    %727 = vmatpush1.msra.mxu0 %v540
    %728 = vmatprep.subr.mxu0 0.0
    %729 = vmatpush1.msra.mxu0 %v541
    %730 = vmatprep.subr.mxu0 0.0
    %731 = vmatpush1.msra.mxu0 %v542
    %732 = vmatprep.subr.mxu0 0.0
    %733 = vmatpush1.msra.mxu0 %v543
    %734 = vmatprep.subr.mxu0 0.0
    %735 = vmatpush1.msra.mxu0 %v544
    %736 = vmatprep.subr.mxu0 0.0
    %737 = vmatpush1.msra.mxu0 %v545
    %738 = vmatprep.subr.mxu0 0.0
    %739 = vmatpush1.msra.mxu0 %v546
    %740 = vmatprep.subr.mxu0 0.0
    %741 = vmatpush1.msra.mxu0 %v547
    %742 = vmatprep.subr.mxu0 0.0
    %743 = vmatpush1.msra.mxu0 %v548
    %744 = vmatprep.subr.mxu0 0.0
    %745 = vmatpush1.msra.mxu0 %v549
    %746 = vmatprep.subr.mxu0 0.0
    %747 = vmatpush1.msra.mxu0 %v550
    %748 = vmatprep.subr.mxu0 0.0
    %749 = vmatpush1.msra.mxu0 %v551
    %750 = vmatprep.mubr.f32.mxu0 %v182
    %751 = vmatmul.mubr.f32.gmra.mrb[0].mxu0 %v180
    %v752 = vpop.f32.mrb[0].mxu0
    %v753 = vadd.f32 %v683, %v752
    %v754 = vpop.f32.mrb[0].mxu0
    %755 = vdwg.mxu0
    %756 = vmatprep.subr.mxu0 0.0
    %757 = vmatpush1.msra.mxu0 %v552
    %758 = vmatprep.subr.mxu0 0.0
    %759 = vmatpush1.msra.mxu0 %v553
    %760 = vmatprep.subr.mxu0 0.0
    %761 = vmatpush1.msra.mxu0 %v554
    %762 = vmatprep.subr.mxu0 0.0
    %763 = vmatpush1.msra.mxu0 %v555
    %764 = vmatprep.subr.mxu0 0.0
    %765 = vmatpush1.msra.mxu0 %v556
    %766 = vmatprep.subr.mxu0 0.0
    %767 = vmatpush1.msra.mxu0 %v557
    %768 = vmatprep.subr.mxu0 0.0
    %769 = vmatpush1.msra.mxu0 %v558
    %770 = vmatprep.subr.mxu0 0.0
    %771 = vmatpush1.msra.mxu0 %v559
    %772 = vmatprep.subr.mxu0 0.0
    %773 = vmatpush1.msra.mxu0 %v560
    %774 = vmatprep.subr.mxu0 0.0
    %775 = vmatpush1.msra.mxu0 %v561
    %776 = vmatprep.subr.mxu0 0.0
    %777 = vmatpush1.msra.mxu0 %v562
    %778 = vmatprep.subr.mxu0 0.0
    %779 = vmatpush1.msra.mxu0 %v563
    %780 = vmatprep.subr.mxu0 0.0
    %781 = vmatpush1.msra.mxu0 %v564
    %782 = vmatprep.subr.mxu0 0.0
    %783 = vmatpush1.msra.mxu0 %v565
    %784 = vmatprep.subr.mxu0 0.0
    %785 = vmatpush1.msra.mxu0 %v566
    %786 = vmatprep.subr.mxu0 0.0
    %787 = vmatpush1.msra.mxu0 %v567
    %788 = vmatprep.subr.mxu0 0.0
    %789 = vmatpush1.msra.mxu0 %v568
    %790 = vmatprep.subr.mxu0 0.0
    %791 = vmatpush1.msra.mxu0 %v569
    %792 = vmatprep.subr.mxu0 0.0
    %793 = vmatpush1.msra.mxu0 %v570
    %794 = vmatprep.subr.mxu0 0.0
    %795 = vmatpush1.msra.mxu0 %v571
    %796 = vmatprep.subr.mxu0 0.0
    %797 = vmatpush1.msra.mxu0 %v572
    %798 = vmatprep.subr.mxu0 0.0
    %799 = vmatpush1.msra.mxu0 %v573
    %800 = vmatprep.subr.mxu0 0.0
    %801 = vmatpush1.msra.mxu0 %v574
    %802 = vmatprep.subr.mxu0 0.0
    %803 = vmatpush1.msra.mxu0 %v575
    %804 = vmatprep.subr.mxu0 0.0
    %805 = vmatpush1.msra.mxu0 %v576
    %806 = vmatprep.subr.mxu0 0.0
    %807 = vmatpush1.msra.mxu0 %v577
    %808 = vmatprep.subr.mxu0 0.0
    %809 = vmatpush1.msra.mxu0 %v578
    %810 = vmatprep.subr.mxu0 0.0
    %811 = vmatpush1.msra.mxu0 %v579
    %812 = vmatprep.subr.mxu0 0.0
    %813 = vmatpush1.msra.mxu0 %v580
    %814 = vmatprep.subr.mxu0 0.0
    %815 = vmatpush1.msra.mxu0 %v581
    %816 = vmatprep.subr.mxu0 0.0
    %817 = vmatpush1.msra.mxu0 %v582
    %818 = vmatprep.subr.mxu0 0.0
    %819 = vmatpush1.msra.mxu0 %v583
    %820 = vmatprep.mubr.f32.mxu0 %v198
    %821 = vmatmul.mubr.f32.gmra.mrb[0].mxu0 %v190
    %v822 = vpop.f32.mrb[0].mxu0
    %v823 = vadd.f32 %v753, %v822
    %v824 = vpop.f32.mrb[0].mxu0
    %825 = vdwg.mxu0
    %826 = vmatprep.subr.mxu0 0.0
    %827 = vmatpush1.msra.mxu0 %v584
    %828 = vmatprep.subr.mxu0 0.0
    %829 = vmatpush1.msra.mxu0 %v585
    %830 = vmatprep.subr.mxu0 0.0
    %831 = vmatpush1.msra.mxu0 %v586
    %832 = vmatprep.subr.mxu0 0.0
    %833 = vmatpush1.msra.mxu0 %v587
    %834 = vmatprep.subr.mxu0 0.0
    %835 = vmatpush1.msra.mxu0 %v588
    %836 = vmatprep.subr.mxu0 0.0
    %837 = vmatpush1.msra.mxu0 %v589
    %838 = vmatprep.subr.mxu0 0.0
    %839 = vmatpush1.msra.mxu0 %v590
    %840 = vmatprep.subr.mxu0 0.0
    %841 = vmatpush1.msra.mxu0 %v591
    %842 = vmatprep.subr.mxu0 0.0
    %843 = vmatpush1.msra.mxu0 %v592
    %844 = vmatprep.subr.mxu0 0.0
    %845 = vmatpush1.msra.mxu0 %v593
    %846 = vmatprep.subr.mxu0 0.0
    %847 = vmatpush1.msra.mxu0 %v594
    %848 = vmatprep.subr.mxu0 0.0
    %849 = vmatpush1.msra.mxu0 %v595
    %850 = vmatprep.subr.mxu0 0.0
    %851 = vmatpush1.msra.mxu0 %v596
    %852 = vmatprep.subr.mxu0 0.0
    %853 = vmatpush1.msra.mxu0 %v597
    %854 = vmatprep.subr.mxu0 0.0
    %855 = vmatpush1.msra.mxu0 %v598
    %856 = vmatprep.subr.mxu0 0.0
    %857 = vmatpush1.msra.mxu0 %v599
    %858 = vmatprep.subr.mxu0 0.0
    %859 = vmatpush1.msra.mxu0 %v600
    %860 = vmatprep.subr.mxu0 0.0
    %861 = vmatpush1.msra.mxu0 %v601
    %862 = vmatprep.subr.mxu0 0.0
    %863 = vmatpush1.msra.mxu0 %v602
    %864 = vmatprep.subr.mxu0 0.0
    %865 = vmatpush1.msra.mxu0 %v603
    %866 = vmatprep.subr.mxu0 0.0
    %867 = vmatpush1.msra.mxu0 %v604
    %868 = vmatprep.subr.mxu0 0.0
    %869 = vmatpush1.msra.mxu0 %v605
    %870 = vmatprep.subr.mxu0 0.0
    %871 = vmatpush1.msra.mxu0 %v606
    %872 = vmatprep.subr.mxu0 0.0
    %873 = vmatpush1.msra.mxu0 %v607
    %874 = vmatprep.subr.mxu0 0.0
    %875 = vmatpush1.msra.mxu0 %v608
    %876 = vmatprep.subr.mxu0 0.0
    %877 = vmatpush1.msra.mxu0 %v609
    %878 = vmatprep.subr.mxu0 0.0
    %879 = vmatpush1.msra.mxu0 %v610
    %880 = vmatprep.subr.mxu0 0.0
    %881 = vmatpush1.msra.mxu0 %v611
    %882 = vmatprep.subr.mxu0 0.0
    %883 = vmatpush1.msra.mxu0 %v612
    %884 = vmatprep.subr.mxu0 0.0
    %885 = vmatpush1.msra.mxu0 %v613
    %886 = vmatprep.subr.mxu0 0.0
    %887 = vmatpush1.msra.mxu0 %v614
    %888 = vmatprep.subr.mxu0 0.0
    %889 = vmatpush1.msra.mxu0 %v615
    %890 = vmatprep.mubr.f32.mxu0 %v199
    %891 = vmatmul.mubr.f32.gmra.mrb[0].mxu0 %v197
    %v892 = vpop.f32.mrb[0].mxu0
    %v893 = vadd.f32 %v823, %v892
    %v894 = vpop.f32.mrb[0].mxu0
    %895 = vdwg.mxu0
    %s896 = sld [smem:[#allocation2]]
    %v897 = vstv %s896
    %v898 = vmul.f32 %v485, %v897
    %s899 = sld [smem:[#allocation2 + $0x1]]
    %v900 = vstv %s899
    %v901 = vmul.f32 %v893, %v900
    %v902 = vadd.f32 %v898, %v901
    %v903 = vld [vmem:[%s4] sm:$0x1]
    %v905 = vlaneseq
    %v906 = vshrl.u32 %v905, 7
    %v907 = vsub.s32 0, %v906
    %v908 = vrot.slane %v903, %v907
    %v910 = vadd.f32 %v902, %v908
    %vm911 = vcmask 58368
    %912 = vst.msk [vmem:[#allocation5] sm:$0x3] %vm911, %v910
    // Predicated region
    $region26: #{tpu_custom_call.1} parent=1 // pred_check
      _
    $region27: #{tpu_custom_call.1} parent=1 // pred_check_branch
      %914 = sbr.rel (0) target = $region29
    $region28: #{tpu_custom_call.1} parent=1 // pred_region
      %s916 = ssub.s32 32, 32
      %917 = vsyncadd [#allocation3], %s916
      %s919 = sshll.u32 [#allocation5], 4
      %s920 = int_to_ptr.vmem [resolvable:$true] %s919
      %922 = dma.vmem_to_hbm [thread:$0]  %s920, 32, %s5, [#allocation3]
    $region29: #{tpu_custom_call.1} parent=1 // pred_fallthru
      _
    // Predicated region
    $region30: #{tpu_custom_call.1} parent=1 // pred_check
      _
    $region31: #{tpu_custom_call.1} parent=1 // pred_check_branch
      %924 = sbr.rel (0) target = $region33
    $region32: #{tpu_custom_call.1} parent=1 // pred_region
      %925 = dma.done [#allocation3], 32
    $region33: #{tpu_custom_call.1} parent=1 // pred_fallthru
      _
    %926 = vsyncpa [#allocation3], 1
    %927 = vsyncpa [#allocation4], 1

</llo_original>
